<compile_context>
chip_gen: v7x
topology: tpu7x:2x2x1
jax: 0.10.0
libtpu: 0.0.40
codegen_flags: <defaults>
</compile_context>

<pallas_src>
import functools

import jax
import jax.numpy as jnp
from jax import lax
from jax.experimental import pallas as pl
from jax.experimental.pallas import tpu as pltpu


def _linear_ln_relu(act_bf16, w_bf16, bias, gamma, beta, *, eps, inv_h):
    """One [Linear -> LayerNorm -> ReLU] step.  bf16 MXU operands, f32 math."""
    h = jnp.dot(act_bf16, w_bf16, preferred_element_type=jnp.float32)
    h = h + bias
    # One-pass LN stats: the two cross-lane reductions issue back-to-back.
    mean = jnp.sum(h, axis=-1, keepdims=True) * inv_h
    mean_sq = jnp.sum(h * h, axis=-1, keepdims=True) * inv_h
    var = mean_sq - mean * mean                      # biased, as torch.nn.LayerNorm
    h = (h - mean) * lax.rsqrt(var + eps)
    h = h * gamma + beta
    return jnp.maximum(h, 0.0)


def resnet_block_kernel_resident(x_ref, w_ref, p_ref, o_ref, *, eps, num_layers, hidden_dim):
    # x_ref: (tb, H) input tile; w_ref: (L, H_in, H_out) bf16 (resident);
    # p_ref: (L, 3, H) packed [bias, gamma, beta] f32 (resident); o_ref: (tb, H).
    x = x_ref[...].astype(jnp.float32)
    inv_h = 1.0 / hidden_dim
    act = x.astype(jnp.bfloat16)
    h = None
    for l in range(num_layers):                      # static, fully unrolled
        p = p_ref[l]                                 # (3, H) f32
        h = _linear_ln_relu(act, w_ref[l], p[0:1, :], p[1:2, :], p[2:3, :],
                            eps=eps, inv_h=inv_h)
        if l < num_layers - 1:
            act = h.astype(jnp.bfloat16)
    o_ref[...] = (x + h).astype(o_ref.dtype)         # residual add


def resnet_block_kernel_streamed(x_ref, w_ref, p_ref, o_ref, act_ref, *, eps, hidden_dim):
    # Large-H fallback: one layer per grid step along the innermost axis.
    # x_ref: (tb, H); w_ref: (1, H_in, H_out) bf16; p_ref: (1, 3, H) f32;
    # o_ref: (tb, H); act_ref: (tb, H) bf16 running activation scratch.
    l = pl.program_id(1)
    num_layers = pl.num_programs(1)
    inv_h = 1.0 / hidden_dim

    @pl.when(l == 0)
    def _():
        act_ref[...] = x_ref[...].astype(jnp.bfloat16)

    p = p_ref[0]                                     # (3, H) f32
    h = _linear_ln_relu(act_ref[...], w_ref[0], p[0:1, :], p[1:2, :], p[2:3, :],
                        eps=eps, inv_h=inv_h)

    @pl.when(l < num_layers - 1)                     # skip dead store on last layer
    def _():
        act_ref[...] = h.astype(jnp.bfloat16)

    @pl.when(l == num_layers - 1)
    def _():
        o_ref[...] = (x_ref[...].astype(jnp.float32) + h).astype(o_ref.dtype)


def _default_tb(B):
    # Larger tiles hide the weight stream and keep the 256-wide v6e/v7x MXU fed
    # at small H; keep >= 2 batch tiles when B allows (pipelining + one tile per
    # v7x TensorCore).
    for cand in (1024, 512, 256, 128, 64, 32, 16, 8):
        if B % cand == 0 and B // cand >= 2:
            return cand
    return B


def _physical_vmem_bytes():
    try:
        cap = int(getattr(pltpu.get_tpu_info(), "vmem_capacity_bytes"))
        if cap > 0:
            return cap
    except Exception:
        pass
    return 64 * 1024 * 1024  # conservative default (v7x per-TC VMEM)


def resnet_block(x, weights, biases, gammas, betas, *, eps=1e-5, tb=None):
    """x: (B, H); weights: (L, H, H) PyTorch layout (out, in); biases/gammas/betas: (L, H)."""
    B, H = x.shape
    L = weights.shape[0]
    assert L >= 1
    tb = _default_tb(B) if tb is None else tb
    assert B % tb == 0, "batch must be divisible by the batch tile"

    # One-time wrapper-side transpose to (L, H_in, H_out) + bf16 cast: the
    # in-kernel contraction is then a plain act @ W (no per-step transpose).
    w_bf16 = jnp.transpose(weights, (0, 2, 1)).astype(jnp.bfloat16)
    params = jnp.stack([biases, gammas, betas], axis=1).astype(jnp.float32)  # (L, 3, H)

    vmem_cap = _physical_vmem_bytes()
    weight_bytes = L * H * H * 2
    resident = weight_bytes <= (4 << 20)             # all-weights-resident fast path

    if resident:
        kernel = functools.partial(resnet_block_kernel_resident,
                                   eps=eps, num_layers=L, hidden_dim=H)
        grid = (B // tb,)
        in_specs = [
            pl.BlockSpec((tb, H), lambda i: (i, 0)),        # x tile
            pl.BlockSpec((L, H, H), lambda i: (0, 0, 0)),   # full weight stack, resident
            pl.BlockSpec((L, 3, H), lambda i: (0, 0, 0)),   # full packed params, resident
        ]
        out_specs = pl.BlockSpec((tb, H), lambda i: (i, 0))
        scratch_shapes = []
        dim_sem = ("parallel",)
        vmem_est = (2 * weight_bytes                          # weights (conservatively x2)
                    + 2 * L * 8 * H * 4                       # params (sublane padded)
                    + 4 * tb * H * x.dtype.itemsize)          # x + out, double-buffered
    else:
        kernel = functools.partial(resnet_block_kernel_streamed, eps=eps, hidden_dim=H)
        grid = (B // tb, L)                                   # layer axis last ("arbitrary")
        # Near the v7x 64 MiB ceiling, drop the streamed weight block to a single
        # buffer instead of double-buffering.
        if 2 * H * H * 2 > int(0.4 * vmem_cap):
            w_spec = pl.BlockSpec((1, H, H), lambda i, l: (l, 0, 0),
                                  pipeline_mode=pl.Buffered(1))
            w_bufs = 1
        else:
            w_spec = pl.BlockSpec((1, H, H), lambda i, l: (l, 0, 0))
            w_bufs = 2
        in_specs = [
            pl.BlockSpec((tb, H), lambda i, l: (i, 0)),       # x tile, constant across l
            w_spec,                                           # one layer's weights
            pl.BlockSpec((1, 3, H), lambda i, l: (l, 0, 0)),  # packed bias/gamma/beta
        ]
        out_specs = pl.BlockSpec((tb, H), lambda i, l: (i, 0))
        scratch_shapes = [pltpu.VMEM((tb, H), jnp.bfloat16)]  # bf16 running activation
        dim_sem = ("parallel", "arbitrary")
        vmem_est = (w_bufs * H * H * 2
                    + 2 * 8 * H * 4
                    + 4 * tb * H * x.dtype.itemsize
                    + tb * H * 2)

    cp_kwargs = dict(dimension_semantics=dim_sem)
    # v5e's default scoped VMEM is 16 MiB -> bump the limit above ~12 MiB, but
    # never above ~85% of this generation's physical VMEM (64 MiB/TC on v7x).
    if vmem_est > 12 * 1024 * 1024:
        cp_kwargs["vmem_limit_bytes"] = int(min(max(vmem_est * 3 // 2, 32 * 1024 * 1024),
                                                int(0.85 * vmem_cap)))

    return pl.pallas_call(
        kernel,
        out_shape=jax.ShapeDtypeStruct((B, H), x.dtype),
        grid_spec=pltpu.PrefetchScalarGridSpec(
            num_scalar_prefetch=0,
            grid=grid,
            in_specs=in_specs,
            out_specs=out_specs,
            scratch_shapes=scratch_shapes,
        ),
        compiler_params=pltpu.CompilerParams(**cp_kwargs),
    )(x, w_bf16, params)


def reference(x, weights, biases, gammas, betas, eps=1e-5):
    out = x
    L = weights.shape[0]
    for i in range(L):
        out = out @ weights[i].T + biases[i]
        mean = jnp.mean(out, axis=-1, keepdims=True)
        var = jnp.mean((out - mean) ** 2, axis=-1, keepdims=True)
        out = (out - mean) / jnp.sqrt(var + eps) * gammas[i] + betas[i]
        out = jnp.maximum(out, 0.0)
    return x + out


if __name__ == "__main__":
    # hyperparas: hidden_dim=128, block_layer_nums=3 -> 2 (Linear+LN+ReLU) layers
    hidden_dim = 128
    block_layer_nums = 3
    L = block_layer_nums - 1
    batch = 256  # small, but enough for 2 batch tiles (tb=128)

    key = jax.random.PRNGKey(0)
    kx, kw, kb, kg, kbe = jax.random.split(key, 5)

    x = jax.random.normal(kx, (batch, hidden_dim), dtype=jnp.float32)
    # PyTorch layout: (out_features, in_features)
    weights = 0.05 * jax.random.normal(kw, (L, hidden_dim, hidden_dim), dtype=jnp.float32)
    biases = 0.1 * jax.random.normal(kb, (L, hidden_dim), dtype=jnp.float32)
    gammas = 1.0 + 0.1 * jax.random.normal(kg, (L, hidden_dim), dtype=jnp.float32)
    betas = 0.1 * jax.random.normal(kbe, (L, hidden_dim), dtype=jnp.float32)

    out = jax.block_until_ready(resnet_block(x, weights, biases, gammas, betas))

    ref = reference(x, weights, biases, gammas, betas)
    assert out.shape == (batch, hidden_dim)
    # bf16 matmul operands (f32 accumulation) -> ~1e-2-level tolerance vs f32 reference
    assert jnp.allclose(out, ref, atol=3e-2, rtol=3e-2), "mismatch vs reference"

    print("KERNEL_OK")
</pallas_src>

<mosaic_0001>
module attributes {stable_mosaic.version = 11 : i64} {
  func.func @resnet_block_kernel_resident(%arg0: i32, %arg1: memref<128x128xf32, #tpu.memory_space<vmem>>, %arg2: memref<2x128x128xbf16, #tpu.memory_space<vmem>>, %arg3: memref<2x3x128xf32, #tpu.memory_space<vmem>>, %arg4: memref<128x128xf32, #tpu.memory_space<vmem>>) attributes {dimension_semantics = [#tpu.dimension_semantics<parallel>], iteration_bounds = array<i64: 2>, scalar_prefetch = 0 : i64, scratch_operands = 0 : i64, tpu.core_type = #tpu.core_type<tc>, window_params = [{transform_indices = @transform_0, window_bounds = array<i64: 128, 128>}, {pipeline_mode = #tpu.pipeline_mode<synchronous>, transform_indices = @transform_1, window_bounds = array<i64: 2, 128, 128>}, {pipeline_mode = #tpu.pipeline_mode<synchronous>, transform_indices = @transform_2, window_bounds = array<i64: 2, 3, 128>}, {transform_indices = @transform_3, window_bounds = array<i64: 128, 128>}]} {
    %c0 = arith.constant 0 : index
    %c0_0 = arith.constant 0 : index
    %0 = vector.load %arg1[%c0, %c0_0] : memref<128x128xf32, #tpu.memory_space<vmem>>, vector<128x128xf32>
    %1 = arith.truncf %0 : vector<128x128xf32> to vector<128x128xbf16>
    %c0_1 = arith.constant 0 : index
    %c0_2 = arith.constant 0 : index
    %c0_3 = arith.constant 0 : index
    %2 = vector.load %arg3[%c0_1, %c0_2, %c0_3] : memref<2x3x128xf32, #tpu.memory_space<vmem>>, vector<1x3x128xf32>
    %3 = vector.shape_cast %2 : vector<1x3x128xf32> to vector<3x128xf32>
    %c0_4 = arith.constant 0 : index
    %c0_5 = arith.constant 0 : index
    %c0_6 = arith.constant 0 : index
    %4 = vector.load %arg2[%c0_4, %c0_5, %c0_6] : memref<2x128x128xbf16, #tpu.memory_space<vmem>>, vector<1x128x128xbf16>
    %5 = vector.shape_cast %4 : vector<1x128x128xbf16> to vector<128x128xbf16>
    %6 = vector.extract_strided_slice %3 {offsets = [0, 0], sizes = [1, 128], strides = [1, 1]} : vector<3x128xf32> to vector<1x128xf32>
    %7 = vector.extract_strided_slice %3 {offsets = [1, 0], sizes = [1, 128], strides = [1, 1]} : vector<3x128xf32> to vector<1x128xf32>
    %8 = vector.extract_strided_slice %3 {offsets = [2, 0], sizes = [1, 128], strides = [1, 1]} : vector<3x128xf32> to vector<1x128xf32>
    %cst = arith.constant dense<0.000000e+00> : vector<128x128xf32>
    %9 = tpu.matmul %1, %5, %cst {dimension_numbers = #tpu.dot_dimension_numbers<[1], [0], [0], [1], [0, 0, 1, 1], [], []>} : vector<128x128xbf16>, vector<128x128xbf16>, vector<128x128xf32> -> vector<128x128xf32>
    %10 = vector.broadcast %6 : vector<1x128xf32> to vector<128x128xf32>
    %11 = arith.addf %9, %10 : vector<128x128xf32>
    %cst_7 = arith.constant dense<0.000000e+00> : vector<128xf32>
    %12 = vector.multi_reduction <add>, %11, %cst_7 [1] : vector<128x128xf32> to vector<128xf32>
    %13 = vector.shape_cast %12 : vector<128xf32> to vector<128x1xf32>
    %cst_8 = arith.constant 7.812500e-03 : f32
    %14 = vector.broadcast %cst_8 : f32 to vector<128x1xf32>
    %15 = arith.mulf %13, %14 : vector<128x1xf32>
    %16 = arith.mulf %11, %11 : vector<128x128xf32>
    %cst_9 = arith.constant dense<0.000000e+00> : vector<128xf32>
    %17 = vector.multi_reduction <add>, %16, %cst_9 [1] : vector<128x128xf32> to vector<128xf32>
    %18 = vector.shape_cast %17 : vector<128xf32> to vector<128x1xf32>
    %cst_10 = arith.constant 7.812500e-03 : f32
    %19 = vector.broadcast %cst_10 : f32 to vector<128x1xf32>
    %20 = arith.mulf %18, %19 : vector<128x1xf32>
    %21 = arith.mulf %15, %15 : vector<128x1xf32>
    %22 = arith.subf %20, %21 : vector<128x1xf32>
    %23 = vector.broadcast %15 : vector<128x1xf32> to vector<128x128xf32>
    %24 = arith.subf %11, %23 : vector<128x128xf32>
    %cst_11 = arith.constant 9.99999974E-6 : f32
    %25 = vector.broadcast %cst_11 : f32 to vector<128x1xf32>
    %26 = arith.addf %22, %25 : vector<128x1xf32>
    %27 = math.rsqrt %26 : vector<128x1xf32>
    %28 = vector.broadcast %27 : vector<128x1xf32> to vector<128x128xf32>
    %29 = arith.mulf %24, %28 : vector<128x128xf32>
    %30 = vector.broadcast %7 : vector<1x128xf32> to vector<128x128xf32>
    %31 = arith.mulf %29, %30 : vector<128x128xf32>
    %32 = vector.broadcast %8 : vector<1x128xf32> to vector<128x128xf32>
    %33 = arith.addf %31, %32 : vector<128x128xf32>
    %cst_12 = arith.constant 0.000000e+00 : f32
    %34 = vector.broadcast %cst_12 : f32 to vector<128x128xf32>
    %35 = arith.maximumf %33, %34 : vector<128x128xf32>
    %36 = arith.truncf %35 : vector<128x128xf32> to vector<128x128xbf16>
    %c1 = arith.constant 1 : index
    %c0_13 = arith.constant 0 : index
    %c0_14 = arith.constant 0 : index
    %37 = vector.load %arg3[%c1, %c0_13, %c0_14] : memref<2x3x128xf32, #tpu.memory_space<vmem>>, vector<1x3x128xf32>
    %38 = vector.shape_cast %37 : vector<1x3x128xf32> to vector<3x128xf32>
    %c1_15 = arith.constant 1 : index
    %c0_16 = arith.constant 0 : index
    %c0_17 = arith.constant 0 : index
    %39 = vector.load %arg2[%c1_15, %c0_16, %c0_17] : memref<2x128x128xbf16, #tpu.memory_space<vmem>>, vector<1x128x128xbf16>
    %40 = vector.shape_cast %39 : vector<1x128x128xbf16> to vector<128x128xbf16>
    %41 = vector.extract_strided_slice %38 {offsets = [0, 0], sizes = [1, 128], strides = [1, 1]} : vector<3x128xf32> to vector<1x128xf32>
    %42 = vector.extract_strided_slice %38 {offsets = [1, 0], sizes = [1, 128], strides = [1, 1]} : vector<3x128xf32> to vector<1x128xf32>
    %43 = vector.extract_strided_slice %38 {offsets = [2, 0], sizes = [1, 128], strides = [1, 1]} : vector<3x128xf32> to vector<1x128xf32>
    %cst_18 = arith.constant dense<0.000000e+00> : vector<128x128xf32>
    %44 = tpu.matmul %36, %40, %cst_18 {dimension_numbers = #tpu.dot_dimension_numbers<[1], [0], [0], [1], [0, 0, 1, 1], [], []>} : vector<128x128xbf16>, vector<128x128xbf16>, vector<128x128xf32> -> vector<128x128xf32>
    %45 = vector.broadcast %41 : vector<1x128xf32> to vector<128x128xf32>
    %46 = arith.addf %44, %45 : vector<128x128xf32>
    %cst_19 = arith.constant dense<0.000000e+00> : vector<128xf32>
    %47 = vector.multi_reduction <add>, %46, %cst_19 [1] : vector<128x128xf32> to vector<128xf32>
    %48 = vector.shape_cast %47 : vector<128xf32> to vector<128x1xf32>
    %cst_20 = arith.constant 7.812500e-03 : f32
    %49 = vector.broadcast %cst_20 : f32 to vector<128x1xf32>
    %50 = arith.mulf %48, %49 : vector<128x1xf32>
    %51 = arith.mulf %46, %46 : vector<128x128xf32>
    %cst_21 = arith.constant dense<0.000000e+00> : vector<128xf32>
    %52 = vector.multi_reduction <add>, %51, %cst_21 [1] : vector<128x128xf32> to vector<128xf32>
    %53 = vector.shape_cast %52 : vector<128xf32> to vector<128x1xf32>
    %cst_22 = arith.constant 7.812500e-03 : f32
    %54 = vector.broadcast %cst_22 : f32 to vector<128x1xf32>
    %55 = arith.mulf %53, %54 : vector<128x1xf32>
    %56 = arith.mulf %50, %50 : vector<128x1xf32>
    %57 = arith.subf %55, %56 : vector<128x1xf32>
    %58 = vector.broadcast %50 : vector<128x1xf32> to vector<128x128xf32>
    %59 = arith.subf %46, %58 : vector<128x128xf32>
    %cst_23 = arith.constant 9.99999974E-6 : f32
    %60 = vector.broadcast %cst_23 : f32 to vector<128x1xf32>
    %61 = arith.addf %57, %60 : vector<128x1xf32>
    %62 = math.rsqrt %61 : vector<128x1xf32>
    %63 = vector.broadcast %62 : vector<128x1xf32> to vector<128x128xf32>
    %64 = arith.mulf %59, %63 : vector<128x128xf32>
    %65 = vector.broadcast %42 : vector<1x128xf32> to vector<128x128xf32>
    %66 = arith.mulf %64, %65 : vector<128x128xf32>
    %67 = vector.broadcast %43 : vector<1x128xf32> to vector<128x128xf32>
    %68 = arith.addf %66, %67 : vector<128x128xf32>
    %cst_24 = arith.constant 0.000000e+00 : f32
    %69 = vector.broadcast %cst_24 : f32 to vector<128x128xf32>
    %70 = arith.maximumf %68, %69 : vector<128x128xf32>
    %71 = arith.addf %0, %70 : vector<128x128xf32>
    %c0_25 = arith.constant 0 : index
    %c0_26 = arith.constant 0 : index
    %72 = vector.load %arg4[%c0_25, %c0_26] : memref<128x128xf32, #tpu.memory_space<vmem>>, vector<128x128xf32>
    tpu.vector_store %arg4[%c0_25, %c0_26], %71 {strides = array<i32>} : memref<128x128xf32, #tpu.memory_space<vmem>>, vector<128x128xf32>,
    return
  }
  func.func @transform_0(%arg0: i32) -> (i32, i32) {
    %c0_i32 = arith.constant 0 : i32
    %c0_i32_0 = arith.constant 0 : i32
    return %arg0, %c0_i32 : i32, i32
  }
  func.func @transform_1(%arg0: i32) -> (i32, i32, i32) {
    %c0_i32 = arith.constant 0 : i32
    %c0_i32_0 = arith.constant 0 : i32
    %c0_i32_1 = arith.constant 0 : i32
    %c0_i32_2 = arith.constant 0 : i32
    return %c0_i32, %c0_i32_0, %c0_i32_1 : i32, i32, i32
  }
  func.func @transform_2(%arg0: i32) -> (i32, i32, i32) {
    %c0_i32 = arith.constant 0 : i32
    %c0_i32_0 = arith.constant 0 : i32
    %c0_i32_1 = arith.constant 0 : i32
    %c0_i32_2 = arith.constant 0 : i32
    return %c0_i32, %c0_i32_0, %c0_i32_1 : i32, i32, i32
  }
  func.func @transform_3(%arg0: i32) -> (i32, i32) {
    %c0_i32 = arith.constant 0 : i32
    %c0_i32_0 = arith.constant 0 : i32
    return %arg0, %c0_i32 : i32, i32
  }
}

</mosaic_0001>

<llo_original>
// kernel: tpu_custom_call.1
$region0: #{tpu_custom_call.1}
  #allocation0 [shape = 'u32[]', space=smem, size = 0x4, offset = 0x4, fixed_abs, tag = 'smem constant byte address 0x4 - core index']
  #allocation1 [shape = 'u32[144,128]{1,0:T(1,128)}', space=vmem, size = 0x12000, scoped, tag = 'internal scratch']
  %s0 = inlined_call_operand.hbm [shape: f32[256,128], index: 0, kind: input, shape index: {}]
  %s1 = inlined_call_operand.hbm [shape: bf16[2,128,128], index: 1, kind: input, shape index: {}]
  %s2 = inlined_call_operand.vmem [shape: f32[2,3,128], index: 2, kind: input, shape index: {}]
  %s3 = inlined_call_operand.hbm [shape: f32[256,128], index: 3, kind: output, shape index: {}]
  %s4 = sld [smem:[#allocation0]]
  $region53: #{tpu_custom_call.1} parent=0
    _
  %s6 = ssub.s32 1, %s4
  %s7 = scalar_select 0, %s6, %s4
  $region1: #{tpu_custom_call.1} parent=0
    #allocation2 [shape = 'u8[131072]{0}', space=vmem, size = 0x20000, scoped, tag = 'input window, operand 0']
    #allocation3 [shape = 's32[2]{0}', space=sflag, size = 0x8, scoped, tag = 'scoped memory for tpu_custom_call.1']
    #allocation4 [shape = 's32[2]{0}', space=sflag, size = 0x8, scoped, tag = 'scoped memory for tpu_custom_call.1']
    #allocation5 [shape = 'u8[65536]{0}', space=vmem, size = 0x10000, scoped, tag = 'input window, operand 1, single buffered']
    #allocation6 [shape = 's32[1]{0}', space=sflag, size = 0x4, scoped, tag = 'scoped memory for tpu_custom_call.1']
    #allocation7 [shape = 'u8[131072]{0}', space=vmem, size = 0x20000, scoped, tag = 'output window, operand 0']
    %8 = vsyncpa [#allocation3], 0
    %s9 = scalar_lea.sflag [#allocation3], 1
    %10 = vsyncpa %s9, 0
    %11 = vsyncpa [#allocation6], 0
    %12 = vsyncpa [#allocation4], 0
    %s13 = scalar_lea.sflag [#allocation4], 1
    %14 = vsyncpa %s13, 0
    loop: start=0, step=1, limit=4
    $region2: #{tpu_custom_call.1} parent=1 // loop_pre_header
      _
    $region3: #{tpu_custom_call.1} parent=1 // loop_header
      %s16 = sphi 0, %s20
      %p17 = scmp.ge.s32.totalorder %s16, 4
      %s26 = sphi 0, %s28
      %s29 = sphi 0, %s26
      %s30 = sphi 0, %s29
      %s46 = sphi 0, %s30
      %s50 = sphi 0, %s50
      %s52 = sphi 0, %s50
      %s53 = sphi 0, %s52
      %s67 = sphi 0, %s53
      %s71 = sphi 0, %s71
      %s73 = sphi 0, %s71
      %s74 = sphi 0, %s73
      %s88 = sphi 0, %s74
      %s94 = sphi 0, %s96
      %s97 = sphi 0, %s94
      %s98 = sphi 0, %s97
      %s114 = sphi 0, %s98
    $region4: #{tpu_custom_call.1} parent=1 // loop_header_branch
      %19 = sbr.rel (%p17) target = $region8
    $region5: #{tpu_custom_call.1} parent=1 // loop_body
      %s21 = ssub.s32 %s16, 1
      %s22 = ssub.s32 %s16, 2
      %s23 = sadd.s32 %s16, 1
      %s24 = ssub.s32 %s16, %s23
      %p25 = scmp.eq.s32.totalorder %s24, 0
      %s27 = sadd.s32 %s26, 1
      %s28 = scalar_select %p25, %s26, %s27
      %p31 = pneg %p25
      %p32 = scmp.eq.s32.totalorder %s16, 1
      %p33 = por %p31, %p32
      %p34 = scmp.ne.s32.totalorder %s26, %s29
      %p35 = scmp.eq.s32.totalorder %s16, 0
      %p36 = por %p34, %p35
      %p37 = scmp.ne.s32.totalorder %s26, %s29
      %p38 = scmp.eq.s32.totalorder %s21, 1
      %p39 = por %p37, %p38
      %p40 = scmp.ne.s32.totalorder %s29, %s30
      %p41 = scmp.eq.s32.totalorder %s21, 0
      %p42 = por %p40, %p41
      %p43 = scmp.ne.s32.totalorder %s29, %s30
      %p44 = scmp.eq.s32.totalorder %s22, 1
      %p45 = por %p43, %p44
      %p47 = scmp.ne.s32.totalorder %s30, %s46
      %p48 = scmp.eq.s32.totalorder %s22, 0
      %p49 = por %p47, %p48
      %s51 = sadd.s32 %s50, 1
      %p54 = scmp.eq.s32.totalorder %s16, 1
      %p55 = scmp.ne.s32.totalorder %s50, %s52
      %p56 = scmp.eq.s32.totalorder %s16, 0
      %p57 = por %p55, %p56
      %p58 = scmp.ne.s32.totalorder %s50, %s52
      %p59 = scmp.eq.s32.totalorder %s21, 1
      %p60 = por %p58, %p59
      %p61 = scmp.ne.s32.totalorder %s52, %s53
      %p62 = scmp.eq.s32.totalorder %s21, 0
      %p63 = por %p61, %p62
      %p64 = scmp.ne.s32.totalorder %s52, %s53
      %p65 = scmp.eq.s32.totalorder %s22, 1
      %p66 = por %p64, %p65
      %p68 = scmp.ne.s32.totalorder %s53, %s67
      %p69 = scmp.eq.s32.totalorder %s22, 0
      %p70 = por %p68, %p69
      %s72 = sadd.s32 %s71, 1
      %p75 = scmp.eq.s32.totalorder %s16, 1
      %p76 = scmp.ne.s32.totalorder %s71, %s73
      %p77 = scmp.eq.s32.totalorder %s16, 0
      %p78 = por %p76, %p77
      %p79 = scmp.ne.s32.totalorder %s71, %s73
      %p80 = scmp.eq.s32.totalorder %s21, 1
      %p81 = por %p79, %p80
      %p82 = scmp.ne.s32.totalorder %s73, %s74
      %p83 = scmp.eq.s32.totalorder %s21, 0
      %p84 = por %p82, %p83
      %p85 = scmp.ne.s32.totalorder %s73, %s74
      %p86 = scmp.eq.s32.totalorder %s22, 1
      %p87 = por %p85, %p86
      %p89 = scmp.ne.s32.totalorder %s74, %s88
      %p90 = scmp.eq.s32.totalorder %s22, 0
      %p91 = por %p89, %p90
      %s92 = ssub.s32 %s16, %s23
      %p93 = scmp.eq.s32.totalorder %s92, 0
      %s95 = sadd.s32 %s94, 1
      %s96 = scalar_select %p93, %s94, %s95
      %p99 = pneg %p93
      %p100 = scmp.eq.s32.totalorder %s16, 1
      %p101 = por %p99, %p100
      %p102 = scmp.ne.s32.totalorder %s94, %s97
      %p103 = scmp.eq.s32.totalorder %s16, 0
      %p104 = por %p102, %p103
      %p105 = scmp.ne.s32.totalorder %s94, %s97
      %p106 = scmp.eq.s32.totalorder %s21, 1
      %p107 = por %p105, %p106
      %p108 = scmp.ne.s32.totalorder %s97, %s98
      %p109 = scmp.eq.s32.totalorder %s21, 0
      %p110 = por %p108, %p109
      %p111 = scmp.ne.s32.totalorder %s97, %s98
      %p112 = scmp.eq.s32.totalorder %s22, 1
      %p113 = por %p111, %p112
      %p115 = scmp.ne.s32.totalorder %s98, %s114
      %p116 = scmp.eq.s32.totalorder %s22, 0
      %p117 = por %p115, %p116
      %p118 = scmp.le.s32.totalorder 1, %s16
      %p119 = scmp.lt.s32.totalorder %s16, 3
      %p120 = pnand %p118, %p119
      %p121 = pneg %p120
      // Predicated region
      $region9: #{tpu_custom_call.1} parent=5 // pred_check
        _
      $region10: #{tpu_custom_call.1} parent=5 // pred_check_branch
        %123 = sbr.rel (%p120) target = $region12
      $region11: #{tpu_custom_call.1} parent=5 // pred_region
        %s124 = ssub.s32 %s16, 1
        // Predicated region
        $region13: #{tpu_custom_call.1} parent=11 // pred_check
          %p125 = pneg %p63
        $region14: #{tpu_custom_call.1} parent=11 // pred_check_branch
          %127 = sbr.rel (%p125) target = $region16
        $region15: #{tpu_custom_call.1} parent=11 // pred_region
          %s129 = ssub.s32 2048, 2048
          %130 = vsyncadd [#allocation6], %s129
          %s131 = sshll.u32 [#allocation5], 4
          %s132 = int_to_ptr.vmem [resolvable:$true] %s131
          %137 = dma.hbm_to_vmem [thread:$0]  %s1, 2048, %s132, [#allocation6], 64, 64, 4
        $region16: #{tpu_custom_call.1} parent=11 // pred_fallthru
          _
        // Predicated region
        $region17: #{tpu_custom_call.1} parent=11 // pred_check
          %p138 = pneg %p84
        $region18: #{tpu_custom_call.1} parent=11 // pred_check_branch
          %140 = sbr.rel (%p138) target = $region20
        $region19: #{tpu_custom_call.1} parent=11 // pred_region
          _
        $region20: #{tpu_custom_call.1} parent=11 // pred_fallthru
          _
      $region12: #{tpu_custom_call.1} parent=5 // pred_fallthru
        _
      %p141 = scmp.lt.s32.totalorder %s16, 2
      // Predicated region
      $region21: #{tpu_custom_call.1} parent=5 // pred_check
        %p142 = pneg %p141
      $region22: #{tpu_custom_call.1} parent=5 // pred_check_branch
        %144 = sbr.rel (%p142) target = $region24
      $region23: #{tpu_custom_call.1} parent=5 // pred_region
        // Predicated region
        $region25: #{tpu_custom_call.1} parent=23 // pred_check
          %p145 = pneg %p36
        $region26: #{tpu_custom_call.1} parent=23 // pred_check_branch
          %147 = sbr.rel (%p145) target = $region28
        $region27: #{tpu_custom_call.1} parent=23 // pred_region
          %s148 = sand.u32 %s26, 1
          %s149 = scalar_lea.sflag [#allocation3], %s148
          %s150 = sand.u32 %s26, 1
          %s151 = smul.addr %s150, 128
          %s152 = scalar_lea.vmem [#allocation2], %s151
          %s153 = smul.u32 16, %s16
          %s155 = ssub.s32 2048, 2048
          %156 = vsyncadd %s149, %s155
          %s157 = smul.addr %s153, 128
          %s158 = scalar_lea.hbm %s0, %s157
          %s159 = sshll.u32 %s152, 4
          %s160 = int_to_ptr.vmem [resolvable:$true] %s159
          %165 = dma.hbm_to_vmem [thread:$0]  %s158, 2048, %s160, %s149, 128, 128, 8
        $region28: #{tpu_custom_call.1} parent=23 // pred_fallthru
          _
      $region24: #{tpu_custom_call.1} parent=5 // pred_fallthru
        _
      %p166 = scmp.le.s32.totalorder 1, %s16
      %p167 = scmp.lt.s32.totalorder %s16, 3
      %p168 = pnand %p166, %p167
      %p169 = pneg %p168
      // Predicated region
      $region29: #{tpu_custom_call.1} parent=5 // pred_check
        _
      $region30: #{tpu_custom_call.1} parent=5 // pred_check_branch
        %171 = sbr.rel (%p168) target = $region32
      $region31: #{tpu_custom_call.1} parent=5 // pred_region
        %s172 = ssub.s32 %s16, 1
        %s173 = sand.u32 %s29, 1
        %s174 = scalar_lea.sflag [#allocation3], %s173
        %s175 = sand.u32 %s29, 1
        %s176 = smul.addr %s175, 128
        %s177 = scalar_lea.vmem [#allocation2], %s176
        // Predicated region
        $region33: #{tpu_custom_call.1} parent=31 // pred_check
          %p178 = pneg %p42
        $region34: #{tpu_custom_call.1} parent=31 // pred_check_branch
          %180 = sbr.rel (%p178) target = $region36
        $region35: #{tpu_custom_call.1} parent=31 // pred_region
          %181 = dma.done %s174, 2048
        $region36: #{tpu_custom_call.1} parent=31 // pred_fallthru
          _
        // Predicated region
        $region37: #{tpu_custom_call.1} parent=31 // pred_check
          %p182 = pneg %p63
        $region38: #{tpu_custom_call.1} parent=31 // pred_check_branch
          %184 = sbr.rel (%p182) target = $region40
        $region39: #{tpu_custom_call.1} parent=31 // pred_region
          %185 = dma.done [#allocation6], 2048
        $region40: #{tpu_custom_call.1} parent=31 // pred_fallthru
          _
        %s186 = sand.u32 %s29, 1
        %s187 = scalar_lea.sflag [#allocation3], %s186
        %s188 = sand.u32 %s29, 1
        %s189 = smul.addr %s188, 128
        %s190 = scalar_lea.vmem [#allocation2], %s189
        %p191 = pneg %p42
        %p192 = pneg %p39
        %p193 = pneg %p63
        %p194 = pneg %p60
        %p195 = pneg %p84
        %p196 = pneg %p81
        %p197 = pneg %p110
        %p198 = pneg %p107
        %s199 = sand.u32 %s97, 1
        %s200 = scalar_lea.sflag [#allocation4], %s199
        %s201 = sand.u32 %s97, 1
        %s202 = smul.addr %s201, 128
        %s203 = scalar_lea.vmem [#allocation7], %s202
        %s204 = smul.u32 16, %s21
        %s205 = smul.u32 16, %s21
        %v207 = vld [vmem:[%s177] sm:$0xff]
        %v208 = vld [vmem:[%s177 + $0x8] sm:$0xff]
        %v209 = vld [vmem:[%s177 + $0x10] sm:$0xff]
        %v210 = vld [vmem:[%s177 + $0x18] sm:$0xff]
        %v211 = vld [vmem:[%s177 + $0x20] sm:$0xff]
        %v212 = vld [vmem:[%s177 + $0x28] sm:$0xff]
        %v213 = vld [vmem:[%s177 + $0x30] sm:$0xff]
        %v214 = vld [vmem:[%s177 + $0x38] sm:$0xff]
        %v215 = vld [vmem:[%s177 + $0x40] sm:$0xff]
        %v216 = vld [vmem:[%s177 + $0x48] sm:$0xff]
        %v217 = vld [vmem:[%s177 + $0x50] sm:$0xff]
        %v218 = vld [vmem:[%s177 + $0x58] sm:$0xff]
        %v219 = vld [vmem:[%s177 + $0x60] sm:$0xff]
        %v220 = vld [vmem:[%s177 + $0x68] sm:$0xff]
        %v221 = vld [vmem:[%s177 + $0x70] sm:$0xff]
        %v222 = vld [vmem:[%s177 + $0x78] sm:$0xff]
        %v223 = vpack.c.bf16 %v208, %v207
        %v224 = vpack.c.bf16 %v210, %v209
        %v225 = vpack.c.bf16 %v212, %v211
        %v226 = vpack.c.bf16 %v214, %v213
        %v227 = vpack.c.bf16 %v216, %v215
        %v228 = vpack.c.bf16 %v218, %v217
        %v229 = vpack.c.bf16 %v220, %v219
        %v230 = vpack.c.bf16 %v222, %v221
        %v231 = vld [vmem:[%s2] sm:$0x7]
        %v232 = vld [vmem:[#allocation5] sm:$0xf]
        %v233 = vld [vmem:[#allocation5 + $0x4] sm:$0xf]
        %v234 = vld [vmem:[#allocation5 + $0x8] sm:$0xf]
        %v235 = vld [vmem:[#allocation5 + $0xc] sm:$0xf]
        %v236 = vld [vmem:[#allocation5 + $0x10] sm:$0xf]
        %v237 = vld [vmem:[#allocation5 + $0x14] sm:$0xf]
        %v238 = vld [vmem:[#allocation5 + $0x18] sm:$0xf]
        %v239 = vld [vmem:[#allocation5 + $0x1c] sm:$0xf]
        %v240 = vld [vmem:[#allocation5 + $0x20] sm:$0xf]
        %v241 = vld [vmem:[#allocation5 + $0x24] sm:$0xf]
        %v242 = vld [vmem:[#allocation5 + $0x28] sm:$0xf]
        %v243 = vld [vmem:[#allocation5 + $0x2c] sm:$0xf]
        %v244 = vld [vmem:[#allocation5 + $0x30] sm:$0xf]
        %v245 = vld [vmem:[#allocation5 + $0x34] sm:$0xf]
        %v246 = vld [vmem:[#allocation5 + $0x38] sm:$0xf]
        %v247 = vld [vmem:[#allocation5 + $0x3c] sm:$0xf]
        %v248 = vlaneseq
        %v249 = vshrl.u32 %v248, 7
        %v250 = vsub.s32 0, %v249
        %v251 = vrot.slane %v231, %v250
        %v268 = vunpack.c.l.b16 %v232
        %v269 = vunpack.c.l.b16 %v233
        %v270 = vunpack.c.l.b16 %v234
        %v271 = vunpack.c.l.b16 %v235
        %v272 = vunpack.c.l.b16 %v236
        %v273 = vunpack.c.l.b16 %v237
        %v274 = vunpack.c.l.b16 %v238
        %v275 = vunpack.c.l.b16 %v239
        %v276 = vunpack.c.l.b16 %v240
        %v277 = vunpack.c.l.b16 %v241
        %v278 = vunpack.c.l.b16 %v242
        %v279 = vunpack.c.l.b16 %v243
        %v280 = vunpack.c.l.b16 %v244
        %v281 = vunpack.c.l.b16 %v245
        %v282 = vunpack.c.l.b16 %v246
        %v283 = vunpack.c.l.b16 %v247
        %v284 = vpack.c.b16 %v269, %v268
        %v285 = vpack.c.b16 %v271, %v270
        %v286 = vpack.c.b16 %v273, %v272
        %v287 = vpack.c.b16 %v275, %v274
        %v288 = vpack.c.b16 %v277, %v276
        %v289 = vpack.c.b16 %v279, %v278
        %v290 = vpack.c.b16 %v281, %v280
        %v291 = vpack.c.b16 %v283, %v282
        %300 = vmatprep.subr.bf16.mxu0 0
        %301 = vmatpush1.bf16.msra.mxu0 %v284
        %302 = vmatprep.subr.bf16.mxu0 0
        %303 = vmatpush1.bf16.msra.mxu0 %v285
        %304 = vmatprep.subr.bf16.mxu0 0
        %305 = vmatpush1.bf16.msra.mxu0 %v286
        %306 = vmatprep.subr.bf16.mxu0 0
        %307 = vmatpush1.bf16.msra.mxu0 %v287
        %308 = vmatprep.subr.bf16.mxu0 0
        %309 = vmatpush1.bf16.msra.mxu0 %v288
        %310 = vmatprep.subr.bf16.mxu0 0
        %311 = vmatpush1.bf16.msra.mxu0 %v289
        %312 = vmatprep.subr.bf16.mxu0 0
        %313 = vmatpush1.bf16.msra.mxu0 %v290
        %314 = vmatprep.subr.bf16.mxu0 0
        %315 = vmatpush1.bf16.msra.mxu0 %v291
        %316 = vmatprep.subr.bf16.mxu0 0
        %317 = vmatpush1.bf16.msra.mxu0 0
        %318 = vmatprep.subr.bf16.mxu0 0
        %319 = vmatpush1.bf16.msra.mxu0 0
        %320 = vmatprep.subr.bf16.mxu0 0
        %321 = vmatpush1.bf16.msra.mxu0 0
        %322 = vmatprep.subr.bf16.mxu0 0
        %323 = vmatpush1.bf16.msra.mxu0 0
        %324 = vmatprep.subr.bf16.mxu0 0
        %325 = vmatpush1.bf16.msra.mxu0 0
        %326 = vmatprep.subr.bf16.mxu0 0
        %327 = vmatpush1.bf16.msra.mxu0 0
        %328 = vmatprep.subr.bf16.mxu0 0
        %329 = vmatpush1.bf16.msra.mxu0 0
        %330 = vmatprep.subr.bf16.mxu0 0
        %331 = vmatpush1.bf16.msra.mxu0 0
        %332 = vmatprep.mubr.bf16.mxu0 0
        %333 = vmatmul.mubr.bf16.gmra.mrb[0].mxu0 %v223
        %v334 = vpop.f32.mrb[0].mxu0
        %v335 = vadd.f32 %v251, %v334
        %v336 = vpop.f32.mrb[0].mxu0
        %v337 = vpop.f32.mrb[0].mxu0
        %v338 = vadd.f32 %v251, %v337
        %v339 = vpop.f32.mrb[0].mxu0
        %340 = vmatprep.mubr.bf16.mxu0 0
        %341 = vmatmul.mubr.bf16.gmra.mrb[0].mxu0 %v224
        %v342 = vpop.f32.mrb[0].mxu0
        %v343 = vadd.f32 %v251, %v342
        %v344 = vpop.f32.mrb[0].mxu0
        %v345 = vpop.f32.mrb[0].mxu0
        %v346 = vadd.f32 %v251, %v345
        %v347 = vpop.f32.mrb[0].mxu0
        %348 = vmatprep.mubr.bf16.mxu0 0
        %349 = vmatmul.mubr.bf16.gmra.mrb[0].mxu0 %v225
        %v350 = vpop.f32.mrb[0].mxu0
        %v351 = vadd.f32 %v251, %v350
        %v352 = vpop.f32.mrb[0].mxu0
        %v353 = vpop.f32.mrb[0].mxu0
        %v354 = vadd.f32 %v251, %v353
        %v355 = vpop.f32.mrb[0].mxu0
        %356 = vmatprep.mubr.bf16.mxu0 0
        %357 = vmatmul.mubr.bf16.gmra.mrb[0].mxu0 %v226
        %v358 = vpop.f32.mrb[0].mxu0
        %v359 = vadd.f32 %v251, %v358
        %v360 = vpop.f32.mrb[0].mxu0
        %v361 = vpop.f32.mrb[0].mxu0
        %v362 = vadd.f32 %v251, %v361
        %v363 = vpop.f32.mrb[0].mxu0
        %364 = vmatprep.mubr.bf16.mxu0 0
        %365 = vmatmul.mubr.bf16.gmra.mrb[0].mxu0 %v227
        %v366 = vpop.f32.mrb[0].mxu0
        %v367 = vadd.f32 %v251, %v366
        %v368 = vpop.f32.mrb[0].mxu0
        %v369 = vpop.f32.mrb[0].mxu0
        %v370 = vadd.f32 %v251, %v369
        %v371 = vpop.f32.mrb[0].mxu0
        %372 = vmatprep.mubr.bf16.mxu0 0
        %373 = vmatmul.mubr.bf16.gmra.mrb[0].mxu0 %v228
        %v374 = vpop.f32.mrb[0].mxu0
        %v375 = vadd.f32 %v251, %v374
        %v376 = vpop.f32.mrb[0].mxu0
        %v377 = vpop.f32.mrb[0].mxu0
        %v378 = vadd.f32 %v251, %v377
        %v379 = vpop.f32.mrb[0].mxu0
        %380 = vmatprep.mubr.bf16.mxu0 0
        %381 = vmatmul.mubr.bf16.gmra.mrb[0].mxu0 %v229
        %v382 = vpop.f32.mrb[0].mxu0
        %v383 = vadd.f32 %v251, %v382
        %v384 = vpop.f32.mrb[0].mxu0
        %v385 = vpop.f32.mrb[0].mxu0
        %v386 = vadd.f32 %v251, %v385
        %v387 = vpop.f32.mrb[0].mxu0
        %388 = vmatprep.mubr.bf16.mxu0 0
        %389 = vmatmul.mubr.bf16.gmra.mrb[0].mxu0 %v230
        %v390 = vpop.f32.mrb[0].mxu0
        %v391 = vadd.f32 %v251, %v390
        %v392 = vpop.f32.mrb[0].mxu0
        %v393 = vpop.f32.mrb[0].mxu0
        %v394 = vadd.f32 %v251, %v393
        %v395 = vpop.f32.mrb[0].mxu0
        %396 = vdwg.mxu0
        %397 = vadd.xlane.f32.xlu0 %v335
        %v398 = vpop.xlane.xlu0 %397
        %399 = vadd.xlane.f32.xlu0 %v338
        %v400 = vpop.xlane.xlu0 %399
        %401 = vadd.xlane.f32.xlu0 %v343
        %v402 = vpop.xlane.xlu0 %401
        %403 = vadd.xlane.f32.xlu0 %v346
        %v404 = vpop.xlane.xlu0 %403
        %405 = vadd.xlane.f32.xlu0 %v351
        %v406 = vpop.xlane.xlu0 %405
        %407 = vadd.xlane.f32.xlu0 %v354
        %v408 = vpop.xlane.xlu0 %407
        %409 = vadd.xlane.f32.xlu0 %v359
        %v410 = vpop.xlane.xlu0 %409
        %411 = vadd.xlane.f32.xlu0 %v362
        %v412 = vpop.xlane.xlu0 %411
        %413 = vadd.xlane.f32.xlu0 %v367
        %v414 = vpop.xlane.xlu0 %413
        %415 = vadd.xlane.f32.xlu0 %v370
        %v416 = vpop.xlane.xlu0 %415
        %417 = vadd.xlane.f32.xlu0 %v375
        %v418 = vpop.xlane.xlu0 %417
        %419 = vadd.xlane.f32.xlu0 %v378
        %v420 = vpop.xlane.xlu0 %419
        %421 = vadd.xlane.f32.xlu0 %v383
        %v422 = vpop.xlane.xlu0 %421
        %423 = vadd.xlane.f32.xlu0 %v386
        %v424 = vpop.xlane.xlu0 %423
        %425 = vadd.xlane.f32.xlu0 %v391
        %v426 = vpop.xlane.xlu0 %425
        %427 = vadd.xlane.f32.xlu0 %v394
        %v428 = vpop.xlane.xlu0 %427
        %v429 = vmul.f32 %v398, 0.0078125
        %v430 = vmul.f32 %v400, 0.0078125
        %v431 = vmul.f32 %v402, 0.0078125
        %v432 = vmul.f32 %v404, 0.0078125
        %v433 = vmul.f32 %v406, 0.0078125
        %v434 = vmul.f32 %v408, 0.0078125
        %v435 = vmul.f32 %v410, 0.0078125
        %v436 = vmul.f32 %v412, 0.0078125
        %v437 = vmul.f32 %v414, 0.0078125
        %v438 = vmul.f32 %v416, 0.0078125
        %v439 = vmul.f32 %v418, 0.0078125
        %v440 = vmul.f32 %v420, 0.0078125
        %v441 = vmul.f32 %v422, 0.0078125
        %v442 = vmul.f32 %v424, 0.0078125
        %v443 = vmul.f32 %v426, 0.0078125
        %v444 = vmul.f32 %v428, 0.0078125
        %v445 = vmul.f32 %v335, %v335
        %v446 = vmul.f32 %v338, %v338
        %v447 = vmul.f32 %v343, %v343
        %v448 = vmul.f32 %v346, %v346
        %v449 = vmul.f32 %v351, %v351
        %v450 = vmul.f32 %v354, %v354
        %v451 = vmul.f32 %v359, %v359
        %v452 = vmul.f32 %v362, %v362
        %v453 = vmul.f32 %v367, %v367
        %v454 = vmul.f32 %v370, %v370
        %v455 = vmul.f32 %v375, %v375
        %v456 = vmul.f32 %v378, %v378
        %v457 = vmul.f32 %v383, %v383
        %v458 = vmul.f32 %v386, %v386
        %v459 = vmul.f32 %v391, %v391
        %v460 = vmul.f32 %v394, %v394
        %461 = vadd.xlane.f32.xlu0 %v445
        %v462 = vpop.xlane.xlu0 %461
        %463 = vadd.xlane.f32.xlu0 %v446
        %v464 = vpop.xlane.xlu0 %463
        %465 = vadd.xlane.f32.xlu0 %v447
        %v466 = vpop.xlane.xlu0 %465
        %467 = vadd.xlane.f32.xlu0 %v448
        %v468 = vpop.xlane.xlu0 %467
        %469 = vadd.xlane.f32.xlu0 %v449
        %v470 = vpop.xlane.xlu0 %469
        %471 = vadd.xlane.f32.xlu0 %v450
        %v472 = vpop.xlane.xlu0 %471
        %473 = vadd.xlane.f32.xlu0 %v451
        %v474 = vpop.xlane.xlu0 %473
        %475 = vadd.xlane.f32.xlu0 %v452
        %v476 = vpop.xlane.xlu0 %475
        %477 = vadd.xlane.f32.xlu0 %v453
        %v478 = vpop.xlane.xlu0 %477
        %479 = vadd.xlane.f32.xlu0 %v454
        %v480 = vpop.xlane.xlu0 %479
        %481 = vadd.xlane.f32.xlu0 %v455
        %v482 = vpop.xlane.xlu0 %481
        %483 = vadd.xlane.f32.xlu0 %v456
        %v484 = vpop.xlane.xlu0 %483
        %485 = vadd.xlane.f32.xlu0 %v457
        %v486 = vpop.xlane.xlu0 %485
        %487 = vadd.xlane.f32.xlu0 %v458
        %v488 = vpop.xlane.xlu0 %487
        %489 = vadd.xlane.f32.xlu0 %v459
        %v490 = vpop.xlane.xlu0 %489
        %491 = vadd.xlane.f32.xlu0 %v460
        %v492 = vpop.xlane.xlu0 %491
        %v493 = vmul.f32 %v462, 0.0078125
        %v494 = vmul.f32 %v464, 0.0078125
        %v495 = vmul.f32 %v466, 0.0078125
        %v496 = vmul.f32 %v468, 0.0078125
        %v497 = vmul.f32 %v470, 0.0078125
        %v498 = vmul.f32 %v472, 0.0078125
        %v499 = vmul.f32 %v474, 0.0078125
        %v500 = vmul.f32 %v476, 0.0078125
        %v501 = vmul.f32 %v478, 0.0078125
        %v502 = vmul.f32 %v480, 0.0078125
        %v503 = vmul.f32 %v482, 0.0078125
        %v504 = vmul.f32 %v484, 0.0078125
        %v505 = vmul.f32 %v486, 0.0078125
        %v506 = vmul.f32 %v488, 0.0078125
        %v507 = vmul.f32 %v490, 0.0078125
        %v508 = vmul.f32 %v492, 0.0078125
        %v509 = vmul.f32 %v429, %v429
        %v510 = vmul.f32 %v430, %v430
        %v511 = vmul.f32 %v431, %v431
        %v512 = vmul.f32 %v432, %v432
        %v513 = vmul.f32 %v433, %v433
        %v514 = vmul.f32 %v434, %v434
        %v515 = vmul.f32 %v435, %v435
        %v516 = vmul.f32 %v436, %v436
        %v517 = vmul.f32 %v437, %v437
        %v518 = vmul.f32 %v438, %v438
        %v519 = vmul.f32 %v439, %v439
        %v520 = vmul.f32 %v440, %v440
        %v521 = vmul.f32 %v441, %v441
        %v522 = vmul.f32 %v442, %v442
        %v523 = vmul.f32 %v443, %v443
        %v524 = vmul.f32 %v444, %v444
        %v525 = vsub.f32 %v493, %v509
        %v526 = vsub.f32 %v494, %v510
        %v527 = vsub.f32 %v495, %v511
        %v528 = vsub.f32 %v496, %v512
        %v529 = vsub.f32 %v497, %v513
        %v530 = vsub.f32 %v498, %v514
        %v531 = vsub.f32 %v499, %v515
        %v532 = vsub.f32 %v500, %v516
        %v533 = vsub.f32 %v501, %v517
        %v534 = vsub.f32 %v502, %v518
        %v535 = vsub.f32 %v503, %v519
        %v536 = vsub.f32 %v504, %v520
        %v537 = vsub.f32 %v505, %v521
        %v538 = vsub.f32 %v506, %v522
        %v539 = vsub.f32 %v507, %v523
        %v540 = vsub.f32 %v508, %v524
        %v541 = vsub.f32 %v335, %v429
        %v542 = vsub.f32 %v338, %v430
        %v543 = vsub.f32 %v343, %v431
        %v544 = vsub.f32 %v346, %v432
        %v545 = vsub.f32 %v351, %v433
        %v546 = vsub.f32 %v354, %v434
        %v547 = vsub.f32 %v359, %v435
        %v548 = vsub.f32 %v362, %v436
        %v549 = vsub.f32 %v367, %v437
        %v550 = vsub.f32 %v370, %v438
        %v551 = vsub.f32 %v375, %v439
        %v552 = vsub.f32 %v378, %v440
        %v553 = vsub.f32 %v383, %v441
        %v554 = vsub.f32 %v386, %v442
        %v555 = vsub.f32 %v391, %v443
        %v556 = vsub.f32 %v394, %v444
        %v557 = vadd.f32 %v525, 1e-05
        %v558 = vadd.f32 %v526, 1e-05
        %v559 = vadd.f32 %v527, 1e-05
        %v560 = vadd.f32 %v528, 1e-05
        %v561 = vadd.f32 %v529, 1e-05
        %v562 = vadd.f32 %v530, 1e-05
        %v563 = vadd.f32 %v531, 1e-05
        %v564 = vadd.f32 %v532, 1e-05
        %v565 = vadd.f32 %v533, 1e-05
        %v566 = vadd.f32 %v534, 1e-05
        %v567 = vadd.f32 %v535, 1e-05
        %v568 = vadd.f32 %v536, 1e-05
        %v569 = vadd.f32 %v537, 1e-05
        %v570 = vadd.f32 %v538, 1e-05
        %v571 = vadd.f32 %v539, 1e-05
        %v572 = vadd.f32 %v540, 1e-05
        %v573 = vrsqrt.pop %v557
        %v574 = vrsqrt.pop %v558
        %v575 = vrsqrt.pop %v559
        %v576 = vrsqrt.pop %v560
        %v577 = vrsqrt.pop %v561
        %v578 = vrsqrt.pop %v562
        %v579 = vrsqrt.pop %v563
        %v580 = vrsqrt.pop %v564
        %v581 = vrsqrt.pop %v565
        %v582 = vrsqrt.pop %v566
        %v583 = vrsqrt.pop %v567
        %v584 = vrsqrt.pop %v568
        %v585 = vrsqrt.pop %v569
        %v586 = vrsqrt.pop %v570
        %v587 = vrsqrt.pop %v571
        %v588 = vrsqrt.pop %v572
        %v589 = vmul.f32 %v541, %v573
        %v590 = vmul.f32 %v542, %v574
        %v591 = vmul.f32 %v543, %v575
        %v592 = vmul.f32 %v544, %v576
        %v593 = vmul.f32 %v545, %v577
        %v594 = vmul.f32 %v546, %v578
        %v595 = vmul.f32 %v547, %v579
        %v596 = vmul.f32 %v548, %v580
        %v597 = vmul.f32 %v549, %v581
        %v598 = vmul.f32 %v550, %v582
        %v599 = vmul.f32 %v551, %v583
        %v600 = vmul.f32 %v552, %v584
        %v601 = vmul.f32 %v553, %v585
        %v602 = vmul.f32 %v554, %v586
        %v603 = vmul.f32 %v555, %v587
        %v604 = vmul.f32 %v556, %v588
        %v605 = vlaneseq
        %v606 = vshrl.u32 %v605, 7
        %v607 = vsub.s32 1, %v606
        %v608 = vrot.slane %v231, %v607
        %v609 = vmul.f32 %v589, %v608
        %v610 = vmul.f32 %v590, %v608
        %v611 = vmul.f32 %v591, %v608
        %v612 = vmul.f32 %v592, %v608
        %v613 = vmul.f32 %v593, %v608
        %v614 = vmul.f32 %v594, %v608
        %v615 = vmul.f32 %v595, %v608
        %v616 = vmul.f32 %v596, %v608
        %v617 = vmul.f32 %v597, %v608
        %v618 = vmul.f32 %v598, %v608
        %v619 = vmul.f32 %v599, %v608
        %v620 = vmul.f32 %v600, %v608
        %v621 = vmul.f32 %v601, %v608
        %v622 = vmul.f32 %v602, %v608
        %v623 = vmul.f32 %v603, %v608
        %v624 = vmul.f32 %v604, %v608
        %v625 = vlaneseq
        %v626 = vshrl.u32 %v625, 7
        %v627 = vsub.s32 2, %v626
        %v628 = vrot.slane %v231, %v627
        %v629 = vadd.f32 %v609, %v628
        %v630 = vadd.f32 %v610, %v628
        %v631 = vadd.f32 %v611, %v628
        %v632 = vadd.f32 %v612, %v628
        %v633 = vadd.f32 %v613, %v628
        %v634 = vadd.f32 %v614, %v628
        %v635 = vadd.f32 %v615, %v628
        %v636 = vadd.f32 %v616, %v628
        %v637 = vadd.f32 %v617, %v628
        %v638 = vadd.f32 %v618, %v628
        %v639 = vadd.f32 %v619, %v628
        %v640 = vadd.f32 %v620, %v628
        %v641 = vadd.f32 %v621, %v628
        %v642 = vadd.f32 %v622, %v628
        %v643 = vadd.f32 %v623, %v628
        %v644 = vadd.f32 %v624, %v628
        %v645 = vmax.f32 %v629, 0.0
        %v646 = vmax.f32 %v630, 0.0
        %v647 = vmax.f32 %v631, 0.0
        %v648 = vmax.f32 %v632, 0.0
        %v649 = vmax.f32 %v633, 0.0
        %v650 = vmax.f32 %v634, 0.0
        %v651 = vmax.f32 %v635, 0.0
        %v652 = vmax.f32 %v636, 0.0
        %v653 = vmax.f32 %v637, 0.0
        %v654 = vmax.f32 %v638, 0.0
        %v655 = vmax.f32 %v639, 0.0
        %v656 = vmax.f32 %v640, 0.0
        %v657 = vmax.f32 %v641, 0.0
        %v658 = vmax.f32 %v642, 0.0
        %v659 = vmax.f32 %v643, 0.0
        %v660 = vmax.f32 %v644, 0.0
        %v661 = vpack.c.bf16 %v646, %v645
        %v662 = vpack.c.bf16 %v648, %v647
        %v663 = vpack.c.bf16 %v650, %v649
        %v664 = vpack.c.bf16 %v652, %v651
        %v665 = vpack.c.bf16 %v654, %v653
        %v666 = vpack.c.bf16 %v656, %v655
        %v667 = vpack.c.bf16 %v658, %v657
        %v668 = vpack.c.bf16 %v660, %v659
        %s669 = scalar_lea.vmem %s2, 4
        %v670 = vld [vmem:[%s669] sm:$0x7]
        %s671 = scalar_lea.vmem [#allocation5], 64
        %v672 = vld [vmem:[%s671] sm:$0xf]
        %v673 = vld [vmem:[%s671 + $0x4] sm:$0xf]
        %v674 = vld [vmem:[%s671 + $0x8] sm:$0xf]
        %v675 = vld [vmem:[%s671 + $0xc] sm:$0xf]
        %v676 = vld [vmem:[%s671 + $0x10] sm:$0xf]
        %v677 = vld [vmem:[%s671 + $0x14] sm:$0xf]
        %v678 = vld [vmem:[%s671 + $0x18] sm:$0xf]
        %v679 = vld [vmem:[%s671 + $0x1c] sm:$0xf]
        %v680 = vld [vmem:[%s671 + $0x20] sm:$0xf]
        %v681 = vld [vmem:[%s671 + $0x24] sm:$0xf]
        %v682 = vld [vmem:[%s671 + $0x28] sm:$0xf]
        %v683 = vld [vmem:[%s671 + $0x2c] sm:$0xf]
        %v684 = vld [vmem:[%s671 + $0x30] sm:$0xf]
        %v685 = vld [vmem:[%s671 + $0x34] sm:$0xf]
        %v686 = vld [vmem:[%s671 + $0x38] sm:$0xf]
        %v687 = vld [vmem:[%s671 + $0x3c] sm:$0xf]
        %v688 = vlaneseq
        %v689 = vshrl.u32 %v688, 7
        %v690 = vsub.s32 0, %v689
        %v691 = vrot.slane %v670, %v690
        %v708 = vunpack.c.l.b16 %v672
        %v709 = vunpack.c.l.b16 %v673
        %v710 = vunpack.c.l.b16 %v674
        %v711 = vunpack.c.l.b16 %v675
        %v712 = vunpack.c.l.b16 %v676
        %v713 = vunpack.c.l.b16 %v677
        %v714 = vunpack.c.l.b16 %v678
        %v715 = vunpack.c.l.b16 %v679
        %v716 = vunpack.c.l.b16 %v680
        %v717 = vunpack.c.l.b16 %v681
        %v718 = vunpack.c.l.b16 %v682
        %v719 = vunpack.c.l.b16 %v683
        %v720 = vunpack.c.l.b16 %v684
        %v721 = vunpack.c.l.b16 %v685
        %v722 = vunpack.c.l.b16 %v686
        %v723 = vunpack.c.l.b16 %v687
        %v724 = vpack.c.b16 %v709, %v708
        %v725 = vpack.c.b16 %v711, %v710
        %v726 = vpack.c.b16 %v713, %v712
        %v727 = vpack.c.b16 %v715, %v714
        %v728 = vpack.c.b16 %v717, %v716
        %v729 = vpack.c.b16 %v719, %v718
        %v730 = vpack.c.b16 %v721, %v720
        %v731 = vpack.c.b16 %v723, %v722
        %740 = vmatprep.subr.bf16.mxu0 0
        %741 = vmatpush1.bf16.msra.mxu0 %v724
        %742 = vmatprep.subr.bf16.mxu0 0
        %743 = vmatpush1.bf16.msra.mxu0 %v725
        %744 = vmatprep.subr.bf16.mxu0 0
        %745 = vmatpush1.bf16.msra.mxu0 %v726
        %746 = vmatprep.subr.bf16.mxu0 0
        %747 = vmatpush1.bf16.msra.mxu0 %v727
        %748 = vmatprep.subr.bf16.mxu0 0
        %749 = vmatpush1.bf16.msra.mxu0 %v728
        %750 = vmatprep.subr.bf16.mxu0 0
        %751 = vmatpush1.bf16.msra.mxu0 %v729
        %752 = vmatprep.subr.bf16.mxu0 0
        %753 = vmatpush1.bf16.msra.mxu0 %v730
        %754 = vmatprep.subr.bf16.mxu0 0
        %755 = vmatpush1.bf16.msra.mxu0 %v731
        %756 = vmatprep.subr.bf16.mxu0 0
        %757 = vmatpush1.bf16.msra.mxu0 0
        %758 = vmatprep.subr.bf16.mxu0 0
        %759 = vmatpush1.bf16.msra.mxu0 0
        %760 = vmatprep.subr.bf16.mxu0 0
        %761 = vmatpush1.bf16.msra.mxu0 0
        %762 = vmatprep.subr.bf16.mxu0 0
        %763 = vmatpush1.bf16.msra.mxu0 0
        %764 = vmatprep.subr.bf16.mxu0 0
        %765 = vmatpush1.bf16.msra.mxu0 0
        %766 = vmatprep.subr.bf16.mxu0 0
        %767 = vmatpush1.bf16.msra.mxu0 0
        %768 = vmatprep.subr.bf16.mxu0 0
        %769 = vmatpush1.bf16.msra.mxu0 0
        %770 = vmatprep.subr.bf16.mxu0 0
        %771 = vmatpush1.bf16.msra.mxu0 0
        %772 = vmatprep.mubr.bf16.mxu0 0
        %773 = vmatmul.mubr.bf16.gmra.mrb[0].mxu0 %v661
        %v774 = vpop.f32.mrb[0].mxu0
        %v775 = vadd.f32 %v691, %v774
        %v776 = vpop.f32.mrb[0].mxu0
        %v777 = vpop.f32.mrb[0].mxu0
        %v778 = vadd.f32 %v691, %v777
        %v779 = vpop.f32.mrb[0].mxu0
        %780 = vmatprep.mubr.bf16.mxu0 0
        %781 = vmatmul.mubr.bf16.gmra.mrb[0].mxu0 %v662
        %v782 = vpop.f32.mrb[0].mxu0
        %v783 = vadd.f32 %v691, %v782
        %v784 = vpop.f32.mrb[0].mxu0
        %v785 = vpop.f32.mrb[0].mxu0
        %v786 = vadd.f32 %v691, %v785
        %v787 = vpop.f32.mrb[0].mxu0
        %788 = vmatprep.mubr.bf16.mxu0 0
        %789 = vmatmul.mubr.bf16.gmra.mrb[0].mxu0 %v663
        %v790 = vpop.f32.mrb[0].mxu0
        %v791 = vadd.f32 %v691, %v790
        %v792 = vpop.f32.mrb[0].mxu0
        %v793 = vpop.f32.mrb[0].mxu0
        %v794 = vadd.f32 %v691, %v793
        %v795 = vpop.f32.mrb[0].mxu0
        %796 = vmatprep.mubr.bf16.mxu0 0
        %797 = vmatmul.mubr.bf16.gmra.mrb[0].mxu0 %v664
        %v798 = vpop.f32.mrb[0].mxu0
        %v799 = vadd.f32 %v691, %v798
        %v800 = vpop.f32.mrb[0].mxu0
        %v801 = vpop.f32.mrb[0].mxu0
        %v802 = vadd.f32 %v691, %v801
        %v803 = vpop.f32.mrb[0].mxu0
        %804 = vmatprep.mubr.bf16.mxu0 0
        %805 = vmatmul.mubr.bf16.gmra.mrb[0].mxu0 %v665
        %v806 = vpop.f32.mrb[0].mxu0
        %v807 = vadd.f32 %v691, %v806
        %v808 = vpop.f32.mrb[0].mxu0
        %v809 = vpop.f32.mrb[0].mxu0
        %v810 = vadd.f32 %v691, %v809
        %v811 = vpop.f32.mrb[0].mxu0
        %812 = vmatprep.mubr.bf16.mxu0 0
        %813 = vmatmul.mubr.bf16.gmra.mrb[0].mxu0 %v666
        %v814 = vpop.f32.mrb[0].mxu0
        %v815 = vadd.f32 %v691, %v814
        %v816 = vpop.f32.mrb[0].mxu0
        %v817 = vpop.f32.mrb[0].mxu0
        %v818 = vadd.f32 %v691, %v817
        %v819 = vpop.f32.mrb[0].mxu0
        %820 = vmatprep.mubr.bf16.mxu0 0
        %821 = vmatmul.mubr.bf16.gmra.mrb[0].mxu0 %v667
        %v822 = vpop.f32.mrb[0].mxu0
        %v823 = vadd.f32 %v691, %v822
        %v824 = vpop.f32.mrb[0].mxu0
        %v825 = vpop.f32.mrb[0].mxu0
        %v826 = vadd.f32 %v691, %v825
        %v827 = vpop.f32.mrb[0].mxu0
        %828 = vmatprep.mubr.bf16.mxu0 0
        %829 = vmatmul.mubr.bf16.gmra.mrb[0].mxu0 %v668
        %v830 = vpop.f32.mrb[0].mxu0
        %v831 = vadd.f32 %v691, %v830
        %v832 = vpop.f32.mrb[0].mxu0
        %v833 = vpop.f32.mrb[0].mxu0
        %v834 = vadd.f32 %v691, %v833
        %v835 = vpop.f32.mrb[0].mxu0
        %836 = vdwg.mxu0
        %837 = vadd.xlane.f32.xlu0 %v775
        %v838 = vpop.xlane.xlu0 %837
        %839 = vadd.xlane.f32.xlu0 %v778
        %v840 = vpop.xlane.xlu0 %839
        %841 = vadd.xlane.f32.xlu0 %v783
        %v842 = vpop.xlane.xlu0 %841
        %843 = vadd.xlane.f32.xlu0 %v786
        %v844 = vpop.xlane.xlu0 %843
        %845 = vadd.xlane.f32.xlu0 %v791
        %v846 = vpop.xlane.xlu0 %845
        %847 = vadd.xlane.f32.xlu0 %v794
        %v848 = vpop.xlane.xlu0 %847
        %849 = vadd.xlane.f32.xlu0 %v799
        %v850 = vpop.xlane.xlu0 %849
        %851 = vadd.xlane.f32.xlu0 %v802
        %v852 = vpop.xlane.xlu0 %851
        %853 = vadd.xlane.f32.xlu0 %v807
        %v854 = vpop.xlane.xlu0 %853
        %855 = vadd.xlane.f32.xlu0 %v810
        %v856 = vpop.xlane.xlu0 %855
        %857 = vadd.xlane.f32.xlu0 %v815
        %v858 = vpop.xlane.xlu0 %857
        %859 = vadd.xlane.f32.xlu0 %v818
        %v860 = vpop.xlane.xlu0 %859
        %861 = vadd.xlane.f32.xlu0 %v823
        %v862 = vpop.xlane.xlu0 %861
        %863 = vadd.xlane.f32.xlu0 %v826
        %v864 = vpop.xlane.xlu0 %863
        %865 = vadd.xlane.f32.xlu0 %v831
        %v866 = vpop.xlane.xlu0 %865
        %867 = vadd.xlane.f32.xlu0 %v834
        %v868 = vpop.xlane.xlu0 %867
        %v869 = vmul.f32 %v838, 0.0078125
        %v870 = vmul.f32 %v840, 0.0078125
        %v871 = vmul.f32 %v842, 0.0078125
        %v872 = vmul.f32 %v844, 0.0078125
        %v873 = vmul.f32 %v846, 0.0078125
        %v874 = vmul.f32 %v848, 0.0078125
        %v875 = vmul.f32 %v850, 0.0078125
        %v876 = vmul.f32 %v852, 0.0078125
        %v877 = vmul.f32 %v854, 0.0078125
        %v878 = vmul.f32 %v856, 0.0078125
        %v879 = vmul.f32 %v858, 0.0078125
        %v880 = vmul.f32 %v860, 0.0078125
        %v881 = vmul.f32 %v862, 0.0078125
        %v882 = vmul.f32 %v864, 0.0078125
        %v883 = vmul.f32 %v866, 0.0078125
        %v884 = vmul.f32 %v868, 0.0078125
        %v885 = vmul.f32 %v775, %v775
        %v886 = vmul.f32 %v778, %v778
        %v887 = vmul.f32 %v783, %v783
        %v888 = vmul.f32 %v786, %v786
        %v889 = vmul.f32 %v791, %v791
        %v890 = vmul.f32 %v794, %v794
        %v891 = vmul.f32 %v799, %v799
        %v892 = vmul.f32 %v802, %v802
        %v893 = vmul.f32 %v807, %v807
        %v894 = vmul.f32 %v810, %v810
        %v895 = vmul.f32 %v815, %v815
        %v896 = vmul.f32 %v818, %v818
        %v897 = vmul.f32 %v823, %v823
        %v898 = vmul.f32 %v826, %v826
        %v899 = vmul.f32 %v831, %v831
        %v900 = vmul.f32 %v834, %v834
        %901 = vadd.xlane.f32.xlu0 %v885
        %v902 = vpop.xlane.xlu0 %901
        %903 = vadd.xlane.f32.xlu0 %v886
        %v904 = vpop.xlane.xlu0 %903
        %905 = vadd.xlane.f32.xlu0 %v887
        %v906 = vpop.xlane.xlu0 %905
        %907 = vadd.xlane.f32.xlu0 %v888
        %v908 = vpop.xlane.xlu0 %907
        %909 = vadd.xlane.f32.xlu0 %v889
        %v910 = vpop.xlane.xlu0 %909
        %911 = vadd.xlane.f32.xlu0 %v890
        %v912 = vpop.xlane.xlu0 %911
        %913 = vadd.xlane.f32.xlu0 %v891
        %v914 = vpop.xlane.xlu0 %913
        %915 = vadd.xlane.f32.xlu0 %v892
        %v916 = vpop.xlane.xlu0 %915
        %917 = vadd.xlane.f32.xlu0 %v893
        %v918 = vpop.xlane.xlu0 %917
        %919 = vadd.xlane.f32.xlu0 %v894
        %v920 = vpop.xlane.xlu0 %919
        %921 = vadd.xlane.f32.xlu0 %v895
        %v922 = vpop.xlane.xlu0 %921
        %923 = vadd.xlane.f32.xlu0 %v896
        %v924 = vpop.xlane.xlu0 %923
        %925 = vadd.xlane.f32.xlu0 %v897
        %v926 = vpop.xlane.xlu0 %925
        %927 = vadd.xlane.f32.xlu0 %v898
        %v928 = vpop.xlane.xlu0 %927
        %929 = vadd.xlane.f32.xlu0 %v899
        %v930 = vpop.xlane.xlu0 %929
        %931 = vadd.xlane.f32.xlu0 %v900
        %v932 = vpop.xlane.xlu0 %931
        %v933 = vmul.f32 %v902, 0.0078125
        %v934 = vmul.f32 %v904, 0.0078125
        %v935 = vmul.f32 %v906, 0.0078125
        %v936 = vmul.f32 %v908, 0.0078125
        %v937 = vmul.f32 %v910, 0.0078125
        %v938 = vmul.f32 %v912, 0.0078125
        %v939 = vmul.f32 %v914, 0.0078125
        %v940 = vmul.f32 %v916, 0.0078125
        %v941 = vmul.f32 %v918, 0.0078125
        %v942 = vmul.f32 %v920, 0.0078125
        %v943 = vmul.f32 %v922, 0.0078125
        %v944 = vmul.f32 %v924, 0.0078125
        %v945 = vmul.f32 %v926, 0.0078125
        %v946 = vmul.f32 %v928, 0.0078125
        %v947 = vmul.f32 %v930, 0.0078125
        %v948 = vmul.f32 %v932, 0.0078125
        %v949 = vmul.f32 %v869, %v869
        %v950 = vmul.f32 %v870, %v870
        %v951 = vmul.f32 %v871, %v871
        %v952 = vmul.f32 %v872, %v872
        %v953 = vmul.f32 %v873, %v873
        %v954 = vmul.f32 %v874, %v874
        %v955 = vmul.f32 %v875, %v875
        %v956 = vmul.f32 %v876, %v876
        %v957 = vmul.f32 %v877, %v877
        %v958 = vmul.f32 %v878, %v878
        %v959 = vmul.f32 %v879, %v879
        %v960 = vmul.f32 %v880, %v880
        %v961 = vmul.f32 %v881, %v881
        %v962 = vmul.f32 %v882, %v882
        %v963 = vmul.f32 %v883, %v883
        %v964 = vmul.f32 %v884, %v884
        %v965 = vsub.f32 %v933, %v949
        %v966 = vsub.f32 %v934, %v950
        %v967 = vsub.f32 %v935, %v951
        %v968 = vsub.f32 %v936, %v952
        %v969 = vsub.f32 %v937, %v953
        %v970 = vsub.f32 %v938, %v954
        %v971 = vsub.f32 %v939, %v955
        %v972 = vsub.f32 %v940, %v956
        %v973 = vsub.f32 %v941, %v957
        %v974 = vsub.f32 %v942, %v958
        %v975 = vsub.f32 %v943, %v959
        %v976 = vsub.f32 %v944, %v960
        %v977 = vsub.f32 %v945, %v961
        %v978 = vsub.f32 %v946, %v962
        %v979 = vsub.f32 %v947, %v963
        %v980 = vsub.f32 %v948, %v964
        %v981 = vsub.f32 %v775, %v869
        %v982 = vsub.f32 %v778, %v870
        %v983 = vsub.f32 %v783, %v871
        %v984 = vsub.f32 %v786, %v872
        %v985 = vsub.f32 %v791, %v873
        %v986 = vsub.f32 %v794, %v874
        %v987 = vsub.f32 %v799, %v875
        %v988 = vsub.f32 %v802, %v876
        %v989 = vsub.f32 %v807, %v877
        %v990 = vsub.f32 %v810, %v878
        %v991 = vsub.f32 %v815, %v879
        %v992 = vsub.f32 %v818, %v880
        %v993 = vsub.f32 %v823, %v881
        %v994 = vsub.f32 %v826, %v882
        %v995 = vsub.f32 %v831, %v883
        %v996 = vsub.f32 %v834, %v884
        %v997 = vadd.f32 %v965, 1e-05
        %v998 = vadd.f32 %v966, 1e-05
        %v999 = vadd.f32 %v967, 1e-05
        %v1000 = vadd.f32 %v968, 1e-05
        %v1001 = vadd.f32 %v969, 1e-05
        %v1002 = vadd.f32 %v970, 1e-05
        %v1003 = vadd.f32 %v971, 1e-05
        %v1004 = vadd.f32 %v972, 1e-05
        %v1005 = vadd.f32 %v973, 1e-05
        %v1006 = vadd.f32 %v974, 1e-05
        %v1007 = vadd.f32 %v975, 1e-05
        %v1008 = vadd.f32 %v976, 1e-05
        %v1009 = vadd.f32 %v977, 1e-05
        %v1010 = vadd.f32 %v978, 1e-05
        %v1011 = vadd.f32 %v979, 1e-05
        %v1012 = vadd.f32 %v980, 1e-05
        %v1013 = vrsqrt.pop %v997
        %v1014 = vrsqrt.pop %v998
        %v1015 = vrsqrt.pop %v999
        %v1016 = vrsqrt.pop %v1000
        %v1017 = vrsqrt.pop %v1001
        %v1018 = vrsqrt.pop %v1002
        %v1019 = vrsqrt.pop %v1003
        %v1020 = vrsqrt.pop %v1004
        %v1021 = vrsqrt.pop %v1005
        %v1022 = vrsqrt.pop %v1006
        %v1023 = vrsqrt.pop %v1007
        %v1024 = vrsqrt.pop %v1008
        %v1025 = vrsqrt.pop %v1009
        %v1026 = vrsqrt.pop %v1010
        %v1027 = vrsqrt.pop %v1011
        %v1028 = vrsqrt.pop %v1012
        %v1029 = vmul.f32 %v981, %v1013
        %v1030 = vmul.f32 %v982, %v1014
        %v1031 = vmul.f32 %v983, %v1015
        %v1032 = vmul.f32 %v984, %v1016
        %v1033 = vmul.f32 %v985, %v1017
        %v1034 = vmul.f32 %v986, %v1018
        %v1035 = vmul.f32 %v987, %v1019
        %v1036 = vmul.f32 %v988, %v1020
        %v1037 = vmul.f32 %v989, %v1021
        %v1038 = vmul.f32 %v990, %v1022
        %v1039 = vmul.f32 %v991, %v1023
        %v1040 = vmul.f32 %v992, %v1024
        %v1041 = vmul.f32 %v993, %v1025
        %v1042 = vmul.f32 %v994, %v1026
        %v1043 = vmul.f32 %v995, %v1027
        %v1044 = vmul.f32 %v996, %v1028
        %v1045 = vlaneseq
        %v1046 = vshrl.u32 %v1045, 7
        %v1047 = vsub.s32 1, %v1046
        %v1048 = vrot.slane %v670, %v1047
        %v1049 = vmul.f32 %v1029, %v1048
        %v1050 = vmul.f32 %v1030, %v1048
        %v1051 = vmul.f32 %v1031, %v1048
        %v1052 = vmul.f32 %v1032, %v1048
        %v1053 = vmul.f32 %v1033, %v1048
        %v1054 = vmul.f32 %v1034, %v1048
        %v1055 = vmul.f32 %v1035, %v1048
        %v1056 = vmul.f32 %v1036, %v1048
        %v1057 = vmul.f32 %v1037, %v1048
        %v1058 = vmul.f32 %v1038, %v1048
        %v1059 = vmul.f32 %v1039, %v1048
        %v1060 = vmul.f32 %v1040, %v1048
        %v1061 = vmul.f32 %v1041, %v1048
        %v1062 = vmul.f32 %v1042, %v1048
        %v1063 = vmul.f32 %v1043, %v1048
        %v1064 = vmul.f32 %v1044, %v1048
        %v1065 = vlaneseq
        %v1066 = vshrl.u32 %v1065, 7
        %v1067 = vsub.s32 2, %v1066
        %v1068 = vrot.slane %v670, %v1067
        %v1069 = vadd.f32 %v1049, %v1068
        %v1070 = vadd.f32 %v1050, %v1068
        %v1071 = vadd.f32 %v1051, %v1068
        %v1072 = vadd.f32 %v1052, %v1068
        %v1073 = vadd.f32 %v1053, %v1068
        %v1074 = vadd.f32 %v1054, %v1068
        %v1075 = vadd.f32 %v1055, %v1068
        %v1076 = vadd.f32 %v1056, %v1068
        %v1077 = vadd.f32 %v1057, %v1068
        %v1078 = vadd.f32 %v1058, %v1068
        %v1079 = vadd.f32 %v1059, %v1068
        %v1080 = vadd.f32 %v1060, %v1068
        %v1081 = vadd.f32 %v1061, %v1068
        %v1082 = vadd.f32 %v1062, %v1068
        %v1083 = vadd.f32 %v1063, %v1068
        %v1084 = vadd.f32 %v1064, %v1068
        %v1085 = vmax.f32 %v1069, 0.0
        %v1086 = vmax.f32 %v1070, 0.0
        %v1087 = vmax.f32 %v1071, 0.0
        %v1088 = vmax.f32 %v1072, 0.0
        %v1089 = vmax.f32 %v1073, 0.0
        %v1090 = vmax.f32 %v1074, 0.0
        %v1091 = vmax.f32 %v1075, 0.0
        %v1092 = vmax.f32 %v1076, 0.0
        %v1093 = vmax.f32 %v1077, 0.0
        %v1094 = vmax.f32 %v1078, 0.0
        %v1095 = vmax.f32 %v1079, 0.0
        %v1096 = vmax.f32 %v1080, 0.0
        %v1097 = vmax.f32 %v1081, 0.0
        %v1098 = vmax.f32 %v1082, 0.0
        %v1099 = vmax.f32 %v1083, 0.0
        %v1100 = vmax.f32 %v1084, 0.0
        %v1101 = vadd.f32 %v207, %v1085
        %v1102 = vadd.f32 %v208, %v1086
        %v1103 = vadd.f32 %v209, %v1087
        %v1104 = vadd.f32 %v210, %v1088
        %v1105 = vadd.f32 %v211, %v1089
        %v1106 = vadd.f32 %v212, %v1090
        %v1107 = vadd.f32 %v213, %v1091
        %v1108 = vadd.f32 %v214, %v1092
        %v1109 = vadd.f32 %v215, %v1093
        %v1110 = vadd.f32 %v216, %v1094
        %v1111 = vadd.f32 %v217, %v1095
        %v1112 = vadd.f32 %v218, %v1096
        %v1113 = vadd.f32 %v219, %v1097
        %v1114 = vadd.f32 %v220, %v1098
        %v1115 = vadd.f32 %v221, %v1099
        %v1116 = vadd.f32 %v222, %v1100
        %1117 = vst [vmem:[%s203] sm:$0xff] %v1101
        %1118 = vst [vmem:[%s203 + $0x8] sm:$0xff] %v1102
        %1119 = vst [vmem:[%s203 + $0x10] sm:$0xff] %v1103
        %1120 = vst [vmem:[%s203 + $0x18] sm:$0xff] %v1104
        %1121 = vst [vmem:[%s203 + $0x20] sm:$0xff] %v1105
        %1122 = vst [vmem:[%s203 + $0x28] sm:$0xff] %v1106
        %1123 = vst [vmem:[%s203 + $0x30] sm:$0xff] %v1107
        %1124 = vst [vmem:[%s203 + $0x38] sm:$0xff] %v1108
        %1125 = vst [vmem:[%s203 + $0x40] sm:$0xff] %v1109
        %1126 = vst [vmem:[%s203 + $0x48] sm:$0xff] %v1110
        %1127 = vst [vmem:[%s203 + $0x50] sm:$0xff] %v1111
        %1128 = vst [vmem:[%s203 + $0x58] sm:$0xff] %v1112
        %1129 = vst [vmem:[%s203 + $0x60] sm:$0xff] %v1113
        %1130 = vst [vmem:[%s203 + $0x68] sm:$0xff] %v1114
        %1131 = vst [vmem:[%s203 + $0x70] sm:$0xff] %v1115
        %1132 = vst [vmem:[%s203 + $0x78] sm:$0xff] %v1116
        %s1133 = sand.u32 %s97, 1
        %s1134 = scalar_lea.sflag [#allocation4], %s1133
        %s1135 = sand.u32 %s97, 1
        %s1136 = smul.addr %s1135, 128
        %s1137 = scalar_lea.vmem [#allocation7], %s1136
        // Predicated region
        $region41: #{tpu_custom_call.1} parent=31 // pred_check
          %p1138 = pneg %p107
        $region42: #{tpu_custom_call.1} parent=31 // pred_check_branch
          %1140 = sbr.rel (%p1138) target = $region44
        $region43: #{tpu_custom_call.1} parent=31 // pred_region
          %s1141 = smul.u32 16, %s21
          %s1143 = ssub.s32 2048, 2048
          %1144 = vsyncadd %s1134, %s1143
          %s1145 = smul.addr %s1141, 128
          %s1146 = scalar_lea.hbm %s3, %s1145
          %s1147 = sshll.u32 %s1137, 4
          %s1148 = int_to_ptr.vmem [resolvable:$true] %s1147
          %1153 = dma.vmem_to_hbm [thread:$0]  %s1148, 2048, %s1146, %s1134, 128, 128, 8
        $region44: #{tpu_custom_call.1} parent=31 // pred_fallthru
          _
      $region32: #{tpu_custom_call.1} parent=5 // pred_fallthru
        _
      %p1154 = scmp.le.s32.totalorder 2, %s16
      // Predicated region
      $region45: #{tpu_custom_call.1} parent=5 // pred_check
        %p1155 = pneg %p1154
      $region46: #{tpu_custom_call.1} parent=5 // pred_check_branch
        %1157 = sbr.rel (%p1155) target = $region48
      $region47: #{tpu_custom_call.1} parent=5 // pred_region
        %s1158 = ssub.s32 %s16, 2
        // Predicated region
        $region49: #{tpu_custom_call.1} parent=47 // pred_check
          %p1159 = pneg %p113
        $region50: #{tpu_custom_call.1} parent=47 // pred_check_branch
          %1161 = sbr.rel (%p1159) target = $region52
        $region51: #{tpu_custom_call.1} parent=47 // pred_region
          %s1162 = sand.u32 %s98, 1
          %s1163 = scalar_lea.sflag [#allocation4], %s1162
          %s1164 = sand.u32 %s98, 1
          %s1165 = smul.addr %s1164, 128
          %s1166 = scalar_lea.vmem [#allocation7], %s1165
          %1167 = dma.done %s1163, 2048
        $region52: #{tpu_custom_call.1} parent=47 // pred_fallthru
          _
      $region48: #{tpu_custom_call.1} parent=5 // pred_fallthru
        _
    $region6: #{tpu_custom_call.1} parent=1 // loop_footer
      %s20 = sadd.s32 1, %s16
    $region7: #{tpu_custom_call.1} parent=1 // loop_footer_branch
      %15 = sbr.rel target = $region3
    $region8: #{tpu_custom_call.1} parent=1 // loop_exit
      _
    %1168 = vsyncpa [#allocation3], 1
    %s1169 = scalar_lea.sflag [#allocation3], 1
    %1170 = vsyncpa %s1169, 1
    %1171 = vsyncpa [#allocation6], 1
    %1172 = vsyncpa [#allocation4], 1
    %s1173 = scalar_lea.sflag [#allocation4], 1
    %1174 = vsyncpa %s1173, 1

</llo_original>
